<compile_context>
chip_gen: v7x
topology: tpu7x:2x2x1
jax: 0.10.0
libtpu: 0.0.40
codegen_flags: <defaults>
</compile_context>

<pallas_src>
import math

import jax
import jax.numpy as jnp
from jax.experimental import pallas as pl
from jax.experimental.pallas import tpu as pltpu

PI = math.pi
TWO_PI = 2.0 * math.pi


def _round_up(x, m):
    return (x + m - 1) // m * m


def _normalize_angles(x):
    # torch: (angle + pi) % (2*pi) - pi  == jnp.mod semantics (divisor-sign).
    return jnp.mod(x + PI, TWO_PI) - PI


# --------------------------------------------------------------------------- #
# Kernel
# --------------------------------------------------------------------------- #
def qnet_fhrr_kernel(state_ref, projT_ref, trigCT_ref, bias_ref, out_ref):
    """One batch tile.

    state_ref  : (TB, S)      VMEM
    projT_ref  : (S, H)       VMEM   state_projection transposed, grid-invariant
    trigCT_ref : (2H, A_pad)  VMEM   scale*[cos(C).T ; sin(C).T], grid-invariant
    bias_ref   : (1, 1)       SMEM
    out_ref    : (TB, A_pad)  VMEM   padded action columns sliced off by wrapper
    """
    # Projection on the MXU (K = S is tiny: just a few vmatmul pushes, keeps the
    # VALU/XLU slots free for the sin/cos polynomial lowering).
    proj = jnp.dot(state_ref[...], projT_ref[...],
                   preferred_element_type=jnp.float32)               # (TB, H)
    # NOTE: intermediate angle normalizations are dropped (cos is 2*pi-periodic).
    # For extreme-magnitude states, a single `jnp.mod(proj + PI, TWO_PI) - PI`
    # here would restore exact range-reduction parity with the reference.

    # EUP transcendentals + lane-axis concat (H % 128 == 0, so this is pure
    # layout plumbing).
    trig = jnp.concatenate([jnp.cos(proj), jnp.sin(proj)], axis=-1)   # (TB, 2H)

    # Single fused MXU contraction; scaling_factor is pre-folded into the table.
    sim = jnp.dot(trig, trigCT_ref[...],
                  preferred_element_type=jnp.float32)                 # (TB, A_pad)

    # Lane-dense store of the whole padded tile (one unmasked vst stream).
    out_ref[...] = sim + bias_ref[0, 0]


# --------------------------------------------------------------------------- #
# Parameter preparation (done ONCE, outside the per-call hot path)
# --------------------------------------------------------------------------- #
def prepare_qnet_params(state_projection, action_vectors, q_hypervector,
                        scaling_factor, bias):
    state_projection = jnp.asarray(state_projection, jnp.float32)   # (H, S)
    action_vectors = jnp.asarray(action_vectors, jnp.float32)       # (A, H)
    q_hypervector = jnp.asarray(q_hypervector, jnp.float32)         # (H,)
    scale = jnp.asarray(scaling_factor, jnp.float32)

    A, H = action_vectors.shape
    A_pad = _round_up(A, 128)                                       # lane-align N

    projT = state_projection.T                                      # (S, H)
    C = (q_hypervector[None, :] - action_vectors
         - action_vectors[0][None, :])                              # (A, H)

    # Fused trig table (scaling_factor folded in); padded action columns are 0
    # so the padded similarity columns come out as exactly `bias` and are
    # discarded by the wrapper slice.
    # TODO(synk): for production hyper_dims consider a bf16 table (halves DMA /
    # residency) after validating the 1e-3 tolerance.
    trigCT = jnp.zeros((2 * H, A_pad), jnp.float32)
    trigCT = trigCT.at[:H, :A].set(scale * jnp.cos(C).T)
    trigCT = trigCT.at[H:, :A].set(scale * jnp.sin(C).T)

    return {
        "projT": projT,
        "trigCT": trigCT,
        "bias": jnp.asarray(bias, jnp.float32).reshape(1, 1),
        "num_actions": A,
    }


# --------------------------------------------------------------------------- #
# Batch tile selection (VMEM budgeted; generation-aware)
# --------------------------------------------------------------------------- #
def _choose_batch_tile(B, S, H, A_pad):
    """Pick TB so per-tile VMEM stays inside a conservative budget sized for
    v7x (64 MiB physical / 32 MiB default scoped), while keeping >= 2 grid
    tiles for large batches so the 'parallel' axis can shard across cores."""
    b8 = _round_up(B, 8)
    if b8 <= 512:
        return b8                                       # single tile; amortize grid overhead
    budget = 24 * 1024 * 1024                           # headroom under 32 MiB scoped
    resident = 4 * (S * H + 2 * H * A_pad) * 2          # projT + trigCT (pipeline buffers)
    per_row = 4 * (2 * S + 2 * A_pad + 5 * H)           # state/out I/O + proj/cos/sin/concat live
    tb = max(512, min(2048, (budget - resident) // per_row))
    tb = min(tb, _round_up(-(-b8 // 2), 8))             # >= 2 tiles (megacore)
    return max(8, (tb // 8) * 8)


# --------------------------------------------------------------------------- #
# Forward
# --------------------------------------------------------------------------- #
def qnetwork_fhrr_forward(state, params):
    state = jnp.asarray(state, jnp.float32)
    B, S = state.shape
    H = params["projT"].shape[1]
    A = params["num_actions"]
    A_pad = params["trigCT"].shape[1]

    TB = _choose_batch_tile(B, S, H, A_pad)
    B_pad = _round_up(B, TB)
    if B_pad != B:
        state = jnp.pad(state, ((0, B_pad - B), (0, 0)))

    out = pl.pallas_call(
        qnet_fhrr_kernel,
        out_shape=jax.ShapeDtypeStruct((B_pad, A_pad), jnp.float32),
        grid=(B_pad // TB,),
        in_specs=[
            pl.BlockSpec((TB, S), lambda i: (i, 0)),                 # state tile
            # projT / trigCT are grid-invariant (constant index_map -> never
            # re-fetched). At toy H the extra pipeline buffer is ~0.3 MiB; for
            # production hyper_dims single-buffer them (pl.Buffered(1) /
            # whole-array VMEM operands) to halve their footprint.
            pl.BlockSpec((S, H), lambda i: (0, 0)),                  # projT (resident)
            pl.BlockSpec((2 * H, A_pad), lambda i: (0, 0)),          # fused trig table
            pl.BlockSpec(memory_space=pltpu.MemorySpace.SMEM),       # bias
        ],
        out_specs=pl.BlockSpec((TB, A_pad), lambda i: (i, 0)),       # lane-dense output
        compiler_params=pltpu.CompilerParams(
            dimension_semantics=("parallel",),
            vmem_limit_bytes=32 * 1024 * 1024),
    )(state, params["projT"], params["trigCT"], params["bias"])

    return out[:B, :A]


# --------------------------------------------------------------------------- #
# Pure-JAX reference (matches the PyTorch module exactly)
# --------------------------------------------------------------------------- #
def reference_forward(state, state_projection, action_vectors,
                      q_hypervector, scaling_factor, bias):
    projected = state @ state_projection.T
    state_vec = _normalize_angles(projected)                               # (B, H)
    sav = _normalize_angles(state_vec[:, None, :] + action_vectors[None])  # (B, A, H)
    unbound = _normalize_angles(q_hypervector[None, None, :] - sav)        # (B, A, H)
    sim = jnp.sum(jnp.cos(unbound - action_vectors[0][None, None, :]), axis=-1)
    return scaling_factor * sim + bias


if __name__ == "__main__":
    # LunarLander-v2: state_dim=8, action_dim=4. Small hyper_dim for the test.
    STATE_DIM, ACTION_DIM, HYPER_DIM = 8, 4, 256

    key = jax.random.PRNGKey(0)
    k_state, k_proj, k_act, k_qhv, k_state2 = jax.random.split(key, 5)

    state_projection = jax.random.normal(k_proj, (HYPER_DIM, STATE_DIM),
                                         dtype=jnp.float32)
    action_vectors = _normalize_angles(
        jax.random.normal(k_act, (ACTION_DIM, HYPER_DIM), dtype=jnp.float32))
    q_hypervector = _normalize_angles(
        jax.random.normal(k_qhv, (HYPER_DIM,), dtype=jnp.float32))
    scaling_factor = jnp.float32(1.0)
    bias = jnp.float32(0.0)

    params = prepare_qnet_params(state_projection, action_vectors,
                                 q_hypervector, scaling_factor, bias)

    # Small batch (B=2) and a larger one to exercise batch padding/tiling.
    for B, k in ((2, k_state), (64, k_state2)):
        state = jax.random.normal(k, (B, STATE_DIM), dtype=jnp.float32)

        q_values = qnetwork_fhrr_forward(state, params)
        q_values = jax.block_until_ready(q_values)

        q_ref = reference_forward(state, state_projection, action_vectors,
                                  q_hypervector, scaling_factor, bias)

        assert q_values.shape == (B, ACTION_DIM)
        assert jnp.allclose(q_values, q_ref, atol=5e-3, rtol=5e-3), (q_values, q_ref)

    print("KERNEL_OK")
</pallas_src>

<mosaic_0001>
module attributes {stable_mosaic.version = 11 : i64} {
  func.func @qnet_fhrr_kernel(%arg0: i32, %arg1: memref<8x8xf32, #tpu.memory_space<vmem>>, %arg2: memref<8x256xf32, #tpu.memory_space<vmem>>, %arg3: memref<512x128xf32, #tpu.memory_space<vmem>>, %arg4: memref<1x1xf32, #tpu.memory_space<smem>>, %arg5: memref<8x128xf32, #tpu.memory_space<vmem>>) attributes {dimension_semantics = [#tpu.dimension_semantics<parallel>], iteration_bounds = array<i64: 1>, scalar_prefetch = 0 : i64, scratch_operands = 0 : i64, tpu.core_type = #tpu.core_type<tc>, window_params = [{transform_indices = @transform_0, window_bounds = array<i64: 8, 8>}, {pipeline_mode = #tpu.pipeline_mode<synchronous>, transform_indices = @transform_1, window_bounds = array<i64: 8, 256>}, {pipeline_mode = #tpu.pipeline_mode<synchronous>, transform_indices = @transform_2, window_bounds = array<i64: 512, 128>}, {transform_indices = @transform_3, window_bounds = array<i64: 1, 1>}, {transform_indices = @transform_4, window_bounds = array<i64: 8, 128>}]} {
    %c0 = arith.constant 0 : index
    %c0_0 = arith.constant 0 : index
    %0 = vector.load %arg1[%c0, %c0_0] : memref<8x8xf32, #tpu.memory_space<vmem>>, vector<8x8xf32>
    %c0_1 = arith.constant 0 : index
    %c0_2 = arith.constant 0 : index
    %1 = vector.load %arg2[%c0_1, %c0_2] : memref<8x256xf32, #tpu.memory_space<vmem>>, vector<8x256xf32>
    %cst = arith.constant dense<0.000000e+00> : vector<8x256xf32>
    %2 = tpu.matmul %0, %1, %cst {dimension_numbers = #tpu.dot_dimension_numbers<[1], [0], [0], [1], [0, 0, 1, 1], [], []>} : vector<8x8xf32>, vector<8x256xf32>, vector<8x256xf32> -> vector<8x256xf32>
    %3 = math.cos %2 : vector<8x256xf32>
    %4 = math.sin %2 : vector<8x256xf32>
    %5 = tpu.concatenate %3, %4 in 1 : vector<8x256xf32>, vector<8x256xf32> -> vector<8x512xf32>
    %c0_3 = arith.constant 0 : index
    %c0_4 = arith.constant 0 : index
    %6 = vector.load %arg3[%c0_3, %c0_4] : memref<512x128xf32, #tpu.memory_space<vmem>>, vector<512x128xf32>
    %cst_5 = arith.constant dense<0.000000e+00> : vector<8x128xf32>
    %7 = tpu.matmul %5, %6, %cst_5 {dimension_numbers = #tpu.dot_dimension_numbers<[1], [0], [0], [1], [0, 0, 1, 1], [], []>} : vector<8x512xf32>, vector<512x128xf32>, vector<8x128xf32> -> vector<8x128xf32>
    %c0_6 = arith.constant 0 : index
    %c0_7 = arith.constant 0 : index
    %8 = memref.load %arg4[%c0_6, %c0_7] : memref<1x1xf32, #tpu.memory_space<smem>>
    %9 = vector.broadcast %8 : f32 to vector<8x128xf32>
    %10 = arith.addf %7, %9 : vector<8x128xf32>
    %c0_8 = arith.constant 0 : index
    %c0_9 = arith.constant 0 : index
    %11 = vector.load %arg5[%c0_8, %c0_9] : memref<8x128xf32, #tpu.memory_space<vmem>>, vector<8x128xf32>
    tpu.vector_store %arg5[%c0_8, %c0_9], %10 {strides = array<i32>} : memref<8x128xf32, #tpu.memory_space<vmem>>, vector<8x128xf32>,
    return
  }
  func.func @transform_0(%arg0: i32) -> (i32, i32) {
    %c0_i32 = arith.constant 0 : i32
    %c0_i32_0 = arith.constant 0 : i32
    return %arg0, %c0_i32 : i32, i32
  }
  func.func @transform_1(%arg0: i32) -> (i32, i32) {
    %c0_i32 = arith.constant 0 : i32
    %c0_i32_0 = arith.constant 0 : i32
    %c0_i32_1 = arith.constant 0 : i32
    return %c0_i32, %c0_i32_0 : i32, i32
  }
  func.func @transform_2(%arg0: i32) -> (i32, i32) {
    %c0_i32 = arith.constant 0 : i32
    %c0_i32_0 = arith.constant 0 : i32
    %c0_i32_1 = arith.constant 0 : i32
    return %c0_i32, %c0_i32_0 : i32, i32
  }
  func.func @transform_3(%arg0: i32) -> (i32, i32) {
    %c0_i32 = arith.constant 0 : i32
    %c0_i32_0 = arith.constant 0 : i32
    %c0_i32_1 = arith.constant 0 : i32
    return %c0_i32, %c0_i32_0 : i32, i32
  }
  func.func @transform_4(%arg0: i32) -> (i32, i32) {
    %c0_i32 = arith.constant 0 : i32
    %c0_i32_0 = arith.constant 0 : i32
    return %arg0, %c0_i32 : i32, i32
  }
}

</mosaic_0001>

<llo_original>
// kernel: tpu_custom_call.1
$region0: #{tpu_custom_call.1}
  #allocation0 [shape = 'u32[]', space=smem, size = 0x4, offset = 0x4, fixed_abs, tag = 'smem constant byte address 0x4 - core index']
  #allocation1 [shape = 'u32[144,128]{1,0:T(1,128)}', space=vmem, size = 0x12000, scoped, tag = 'internal scratch']
  #allocation2 [shape = 'f32[1,1]{1,0:T(1,128)S(6)}', space=smem, size = 0x200, scoped, tag = 'scoped memory for tpu_custom_call.1']
  %s0 = inlined_call_operand.hbm [shape: f32[8,8], index: 0, kind: input, shape index: {}]
  %s1 = inlined_call_operand.hbm [shape: f32[8,256], index: 1, kind: input, shape index: {}]
  %s2 = inlined_call_operand.hbm [shape: f32[512,128], index: 2, kind: input, shape index: {}]
  %s3 = inlined_call_operand.<no memory space> [shape: f32[1,1], index: 3, kind: input, shape index: {}]
  %s4 = inlined_call_operand.hbm [shape: f32[8,128], index: 4, kind: output, shape index: {}]
  %s5 = sld [smem:[#allocation0]]
  $region38: #{tpu_custom_call.1} parent=0
    _
  %s7 = ssub.s32 1, %s5
  %s8 = scalar_select 0, %s7, %s5
  %9 = sst [smem:[#allocation2]] %s3
  $region1: #{tpu_custom_call.1} parent=0
    #allocation3 [shape = 'u8[4096]{0}', space=vmem, size = 0x1000, scoped, tag = 'input window, operand 0, single buffered']
    #allocation4 [shape = 's32[1]{0}', space=sflag, size = 0x4, scoped, tag = 'scoped memory for tpu_custom_call.1']
    #allocation5 [shape = 's32[1]{0}', space=sflag, size = 0x4, scoped, tag = 'scoped memory for tpu_custom_call.1']
    #allocation6 [shape = 'u8[8192]{0}', space=vmem, size = 0x2000, scoped, tag = 'input window, operand 1, single buffered']
    #allocation7 [shape = 's32[1]{0}', space=sflag, size = 0x4, scoped, tag = 'scoped memory for tpu_custom_call.1']
    #allocation8 [shape = 'u8[262144]{0}', space=vmem, size = 0x40000, scoped, tag = 'input window, operand 2, single buffered']
    #allocation9 [shape = 'u8[4096]{0}', space=vmem, size = 0x1000, scoped, tag = 'output window, operand 0, single buffered']
    %10 = vsyncpa [#allocation4], 0
    %11 = vsyncpa [#allocation7], 0
    %12 = vsyncpa [#allocation5], 0
    // Predicated region
    $region2: #{tpu_custom_call.1} parent=1 // pred_check
      _
    $region3: #{tpu_custom_call.1} parent=1 // pred_check_branch
      %14 = sbr.rel (0) target = $region5
    $region4: #{tpu_custom_call.1} parent=1 // pred_region
      %s16 = ssub.s32 128, 128
      %17 = vsyncadd [#allocation4], %s16
      %s19 = sshll.u32 [#allocation3], 4
      %s20 = int_to_ptr.vmem [resolvable:$true] %s19
      %22 = dma.hbm_to_vmem [thread:$0]  %s0, 128, %s20, [#allocation4]
    $region5: #{tpu_custom_call.1} parent=1 // pred_fallthru
      _
    // Predicated region
    $region6: #{tpu_custom_call.1} parent=1 // pred_check
      _
    $region7: #{tpu_custom_call.1} parent=1 // pred_check_branch
      %24 = sbr.rel (0) target = $region9
    $region8: #{tpu_custom_call.1} parent=1 // pred_region
      %s26 = ssub.s32 256, 256
      %27 = vsyncadd [#allocation7], %s26
      %s29 = sshll.u32 [#allocation6], 4
      %s30 = int_to_ptr.vmem [resolvable:$true] %s29
      %32 = dma.hbm_to_vmem [thread:$0]  %s1, 256, %s30, [#allocation7]
    $region9: #{tpu_custom_call.1} parent=1 // pred_fallthru
      _
    // Predicated region
    $region10: #{tpu_custom_call.1} parent=1 // pred_check
      _
    $region11: #{tpu_custom_call.1} parent=1 // pred_check_branch
      %34 = sbr.rel (0) target = $region13
    $region12: #{tpu_custom_call.1} parent=1 // pred_region
      %s36 = ssub.s32 8192, 8192
      %37 = vsyncadd [#allocation7], %s36
      %s38 = sshll.u32 [#allocation8], 4
      %s39 = int_to_ptr.vmem [resolvable:$true] %s38
      %44 = dma.hbm_to_vmem [thread:$0]  %s2, 8192, %s39, [#allocation7], 128, 128, 8
    $region13: #{tpu_custom_call.1} parent=1 // pred_fallthru
      _
    // Predicated region
    $region14: #{tpu_custom_call.1} parent=1 // pred_check
      _
    $region15: #{tpu_custom_call.1} parent=1 // pred_check_branch
      %46 = sbr.rel (0) target = $region17
    $region16: #{tpu_custom_call.1} parent=1 // pred_region
      _
    $region17: #{tpu_custom_call.1} parent=1 // pred_fallthru
      _
    // Predicated region
    $region18: #{tpu_custom_call.1} parent=1 // pred_check
      _
    $region19: #{tpu_custom_call.1} parent=1 // pred_check_branch
      %48 = sbr.rel (0) target = $region21
    $region20: #{tpu_custom_call.1} parent=1 // pred_region
      %49 = dma.done [#allocation4], 128
    $region21: #{tpu_custom_call.1} parent=1 // pred_fallthru
      _
    // Predicated region
    $region22: #{tpu_custom_call.1} parent=1 // pred_check
      _
    $region23: #{tpu_custom_call.1} parent=1 // pred_check_branch
      %51 = sbr.rel (0) target = $region25
    $region24: #{tpu_custom_call.1} parent=1 // pred_region
      %52 = dma.done [#allocation7], 256
    $region25: #{tpu_custom_call.1} parent=1 // pred_fallthru
      _
    // Predicated region
    $region26: #{tpu_custom_call.1} parent=1 // pred_check
      _
    $region27: #{tpu_custom_call.1} parent=1 // pred_check_branch
      %54 = sbr.rel (0) target = $region29
    $region28: #{tpu_custom_call.1} parent=1 // pred_region
      %55 = dma.done [#allocation7], 8192
    $region29: #{tpu_custom_call.1} parent=1 // pred_fallthru
      _
    %v56 = vld [vmem:[#allocation3] sm:$0xff]
    %v57 = vld [vmem:[#allocation6] sm:$0xff]
    %v58 = vld [vmem:[#allocation6 + $0x8] sm:$0xff]
    %vm59 = vcmask 64512
    %v61 = vsel %vm59, %v56, 0
    %63 = vmatprep.subr.mxu0 %v58
    %64 = vmatpush1.msra.mxu0 %v57
    %65 = vmatprep.subr.mxu0 0.0
    %66 = vmatpush1.msra.mxu0 0.0
    %67 = vmatprep.subr.mxu0 0.0
    %68 = vmatpush1.msra.mxu0 0.0
    %69 = vmatprep.subr.mxu0 0.0
    %70 = vmatpush1.msra.mxu0 0.0
    %71 = vmatprep.subr.mxu0 0.0
    %72 = vmatpush1.msra.mxu0 0.0
    %73 = vmatprep.subr.mxu0 0.0
    %74 = vmatpush1.msra.mxu0 0.0
    %75 = vmatprep.subr.mxu0 0.0
    %76 = vmatpush1.msra.mxu0 0.0
    %77 = vmatprep.subr.mxu0 0.0
    %78 = vmatpush1.msra.mxu0 0.0
    %79 = vmatprep.subr.mxu0 0.0
    %80 = vmatpush1.msra.mxu0 0.0
    %81 = vmatprep.subr.mxu0 0.0
    %82 = vmatpush1.msra.mxu0 0.0
    %83 = vmatprep.subr.mxu0 0.0
    %84 = vmatpush1.msra.mxu0 0.0
    %85 = vmatprep.subr.mxu0 0.0
    %86 = vmatpush1.msra.mxu0 0.0
    %87 = vmatprep.subr.mxu0 0.0
    %88 = vmatpush1.msra.mxu0 0.0
    %89 = vmatprep.subr.mxu0 0.0
    %90 = vmatpush1.msra.mxu0 0.0
    %91 = vmatprep.subr.mxu0 0.0
    %92 = vmatpush1.msra.mxu0 0.0
    %93 = vmatprep.subr.mxu0 0.0
    %94 = vmatpush1.msra.mxu0 0.0
    %95 = vmatprep.subr.mxu0 0.0
    %96 = vmatpush1.msra.mxu0 0.0
    %97 = vmatprep.subr.mxu0 0.0
    %98 = vmatpush1.msra.mxu0 0.0
    %99 = vmatprep.subr.mxu0 0.0
    %100 = vmatpush1.msra.mxu0 0.0
    %101 = vmatprep.subr.mxu0 0.0
    %102 = vmatpush1.msra.mxu0 0.0
    %103 = vmatprep.subr.mxu0 0.0
    %104 = vmatpush1.msra.mxu0 0.0
    %105 = vmatprep.subr.mxu0 0.0
    %106 = vmatpush1.msra.mxu0 0.0
    %107 = vmatprep.subr.mxu0 0.0
    %108 = vmatpush1.msra.mxu0 0.0
    %109 = vmatprep.subr.mxu0 0.0
    %110 = vmatpush1.msra.mxu0 0.0
    %111 = vmatprep.subr.mxu0 0.0
    %112 = vmatpush1.msra.mxu0 0.0
    %113 = vmatprep.subr.mxu0 0.0
    %114 = vmatpush1.msra.mxu0 0.0
    %115 = vmatprep.subr.mxu0 0.0
    %116 = vmatpush1.msra.mxu0 0.0
    %117 = vmatprep.subr.mxu0 0.0
    %118 = vmatpush1.msra.mxu0 0.0
    %119 = vmatprep.subr.mxu0 0.0
    %120 = vmatpush1.msra.mxu0 0.0
    %121 = vmatprep.subr.mxu0 0.0
    %122 = vmatpush1.msra.mxu0 0.0
    %123 = vmatprep.subr.mxu0 0.0
    %124 = vmatpush1.msra.mxu0 0.0
    %125 = vmatprep.subr.mxu0 0.0
    %126 = vmatpush1.msra.mxu0 0.0
    %127 = vmatprep.mubr.f32.mxu0 0.0
    %128 = vmatmul.mubr.f32.gmra.mrb[0].mxu0 %v61
    %v129 = vpop.f32.mrb[0].mxu0
    %v130 = vadd.f32 0.0, %v129
    %v131 = vpop.f32.mrb[0].mxu0
    %v132 = vadd.f32 0.0, %v131
    %133 = vdwg.mxu0
    %v134 = vand.u32 2147483647, %v130
    %vm135 = vcmp.le.f32.partialorder %v134, 0.7853982
    %vm136 = vcmp.lt.s32.totalorder %v130, 0
    %v137 = vand.u32 %v130, 2139095040
    %v138 = vshrl.u32 %v137, 23
    %v139 = vsub.s32 %v138, 127
    %v140 = vand.u32 2147483647, %v130
    %v141 = vand.u32 %v140, 8388607
    %v142 = vor.u32 %v141, 8388608
    %v143 = vsub.s32 0, %v142
    %v144 = vadd.s32 %v139, 1
    %vm145 = vcmp.gt.s32.totalorder %v144, 0
    %v146 = vsel %vm145, %v144, 0
    %v147 = vshrl.u32 %v146, 5
    %v148 = vand.u32 %v146, 31
    %v149 = vsub.s32 32, %v148
    %v150 = vshrl.u32 683565275, %v149
    %v151 = vshll.u32 683565275, %v148
    %v152 = vshrl.u32 2475754826, %v149
    %v153 = vor.u32 %v151, %v152
    %v154 = vshll.u32 2475754826, %v148
    %v155 = vshrl.u32 2131351028, %v149
    %v156 = vor.u32 %v154, %v155
    %v157 = vshll.u32 2131351028, %v148
    %v158 = vshrl.u32 2102212464, %v149
    %v159 = vor.u32 %v157, %v158
    %v160 = vshll.u32 2102212464, %v148
    %v161 = vshrl.u32 920167782, %v149
    %v162 = vor.u32 %v160, %v161
    %v163 = vshll.u32 920167782, %v148
    %v164 = vshrl.u32 1326507024, %v149
    %v165 = vor.u32 %v163, %v164
    %vm166 = vcmp.lt.s32.totalorder %v147, 1
    %vm167 = vcmp.lt.s32.totalorder %v147, 2
    %vm168 = vcmp.lt.s32.totalorder %v147, 3
    %vm169 = vcmp.lt.s32.totalorder %v147, 4
    %v170 = vsel %vm166, %v150, %v153
    %v171 = vsel %vm169, %v159, 2102212464
    %v172 = vsel %vm168, %v156, %v171
    %v173 = vsel %vm167, %v170, %v172
    %v174 = vsel %vm166, %v153, %v156
    %v175 = vsel %vm169, %v162, 920167782
    %v176 = vsel %vm168, %v159, %v175
    %v177 = vsel %vm167, %v174, %v176
    %v178 = vsel %vm166, %v156, %v159
    %v179 = vsel %vm169, %v165, 1326507024
    %v180 = vsel %vm168, %v162, %v179
    %v181 = vsel %vm167, %v178, %v180
    %v182 = vshll.u32 %v142, 8
    %v183 = vmul.u32.u64.compose %v182, %v181
    %v184 = vextract.low.u32 %v183
    %v185 = vextract.high.u32 %v183
    %v186 = vmul.u32.u64.compose %v182, %v177
    %v187 = vextract.low.u32 %v186
    %v188 = vextract.high.u32 %v186
    %v189 = vmul.u32 %v182, %v173
    %v190 = vadd.s32 %v185, %v187
    %vm191 = vc.u32 %v185, %v187
    %v192 = vadd.s32 %v188, 1
    %v193 = vsel %vm191, %v192, %v188
    %v194 = vadd.s32 %v189, %v193
    %v195 = vadd.s32 %v194, 536870912
    %v196 = vshrl.u32 %v195, 30
    %v197 = vshll.u32 %v196, 30
    %v198 = vsub.s32 %v194, %v197
    %vm199 = vcmp.lt.s32.totalorder %v198, 0
    %v200 = vsub.s32 0, %v198
    %v201 = vsel %vm199, %v200, %v198
    %v202 = vclz %v201
    %v203 = vsub.s32 %v202, 2
    %vm204 = vcmp.gt.s32.totalorder 0, %v203
    %v205 = vsel %vm204, 0, %v203
    %v206 = vsub.s32 32, %v205
    %v207 = vshll.u32 %v198, %v205
    %v208 = vshrl.u32 %v190, %v206
    %v209 = vor.u32 %v207, %v208
    %v210 = vsub.s32 4294967266, %v205
    %v211 = vadd.s32 %v210, 127
    %v212 = vshll.u32 %v211, 23
    %v213 = vor.u32 4788187, %v212
    %v214 = vand.u32 2147483647, %v213
    %v216 = vcvt.s32.f32 %v209
    %v217 = vmul.f32 %v216, %v214
    %v218 = vxor.u32 %v217, 2147483648
    %v219 = vsel %vm136, %v218, %v217
    %v220 = vsub.s32 4, %v196
    %v221 = vsel %vm136, %v220, %v196
    %v222 = vsel %vm135, %v130, %v219
    %v223 = vsel %vm135, 0, %v221
    %v224 = vcosq.f32.pop %v222
    %v225 = vsinq.f32.pop %v222
    %vm226 = vweird.f32 %v130
    %v227 = vand.u32 %v223, 3
    %vm228 = vcmp.lt.s32.totalorder %v227, 2
    %vm229 = vcmp.eq.s32.totalorder %v227, 0
    %v230 = vxor.u32 %v225, 2147483648
    %v231 = vsel %vm229, %v224, %v230
    %vm232 = vcmp.eq.s32.totalorder %v227, 2
    %v233 = vxor.u32 %v224, 2147483648
    %v234 = vsel %vm232, %v233, %v225
    %v235 = vsel %vm228, %v231, %v234
    %v236 = vsel %vm226, nan, %v235
    %v237 = vand.u32 2147483647, %v132
    %vm238 = vcmp.le.f32.partialorder %v237, 0.7853982
    %vm239 = vcmp.lt.s32.totalorder %v132, 0
    %v240 = vand.u32 %v132, 2139095040
    %v241 = vshrl.u32 %v240, 23
    %v242 = vsub.s32 %v241, 127
    %v243 = vand.u32 2147483647, %v132
    %v244 = vand.u32 %v243, 8388607
    %v245 = vor.u32 %v244, 8388608
    %v246 = vsub.s32 0, %v245
    %v247 = vadd.s32 %v242, 1
    %vm248 = vcmp.gt.s32.totalorder %v247, 0
    %v249 = vsel %vm248, %v247, 0
    %v250 = vshrl.u32 %v249, 5
    %v251 = vand.u32 %v249, 31
    %v252 = vsub.s32 32, %v251
    %v253 = vshrl.u32 683565275, %v252
    %v254 = vshll.u32 683565275, %v251
    %v255 = vshrl.u32 2475754826, %v252
    %v256 = vor.u32 %v254, %v255
    %v257 = vshll.u32 2475754826, %v251
    %v258 = vshrl.u32 2131351028, %v252
    %v259 = vor.u32 %v257, %v258
    %v260 = vshll.u32 2131351028, %v251
    %v261 = vshrl.u32 2102212464, %v252
    %v262 = vor.u32 %v260, %v261
    %v263 = vshll.u32 2102212464, %v251
    %v264 = vshrl.u32 920167782, %v252
    %v265 = vor.u32 %v263, %v264
    %v266 = vshll.u32 920167782, %v251
    %v267 = vshrl.u32 1326507024, %v252
    %v268 = vor.u32 %v266, %v267
    %vm269 = vcmp.lt.s32.totalorder %v250, 1
    %vm270 = vcmp.lt.s32.totalorder %v250, 2
    %vm271 = vcmp.lt.s32.totalorder %v250, 3
    %vm272 = vcmp.lt.s32.totalorder %v250, 4
    %v273 = vsel %vm269, %v253, %v256
    %v274 = vsel %vm272, %v262, 2102212464
    %v275 = vsel %vm271, %v259, %v274
    %v276 = vsel %vm270, %v273, %v275
    %v277 = vsel %vm269, %v256, %v259
    %v278 = vsel %vm272, %v265, 920167782
    %v279 = vsel %vm271, %v262, %v278
    %v280 = vsel %vm270, %v277, %v279
    %v281 = vsel %vm269, %v259, %v262
    %v282 = vsel %vm272, %v268, 1326507024
    %v283 = vsel %vm271, %v265, %v282
    %v284 = vsel %vm270, %v281, %v283
    %v285 = vshll.u32 %v245, 8
    %v286 = vmul.u32.u64.compose %v285, %v284
    %v287 = vextract.low.u32 %v286
    %v288 = vextract.high.u32 %v286
    %v289 = vmul.u32.u64.compose %v285, %v280
    %v290 = vextract.low.u32 %v289
    %v291 = vextract.high.u32 %v289
    %v292 = vmul.u32 %v285, %v276
    %v293 = vadd.s32 %v288, %v290
    %vm294 = vc.u32 %v288, %v290
    %v295 = vadd.s32 %v291, 1
    %v296 = vsel %vm294, %v295, %v291
    %v297 = vadd.s32 %v292, %v296
    %v298 = vadd.s32 %v297, 536870912
    %v299 = vshrl.u32 %v298, 30
    %v300 = vshll.u32 %v299, 30
    %v301 = vsub.s32 %v297, %v300
    %vm302 = vcmp.lt.s32.totalorder %v301, 0
    %v303 = vsub.s32 0, %v301
    %v304 = vsel %vm302, %v303, %v301
    %v305 = vclz %v304
    %v306 = vsub.s32 %v305, 2
    %vm307 = vcmp.gt.s32.totalorder 0, %v306
    %v308 = vsel %vm307, 0, %v306
    %v309 = vsub.s32 32, %v308
    %v310 = vshll.u32 %v301, %v308
    %v311 = vshrl.u32 %v293, %v309
    %v312 = vor.u32 %v310, %v311
    %v313 = vsub.s32 4294967266, %v308
    %v314 = vadd.s32 %v313, 127
    %v315 = vshll.u32 %v314, 23
    %v316 = vor.u32 4788187, %v315
    %v317 = vand.u32 2147483647, %v316
    %v319 = vcvt.s32.f32 %v312
    %v320 = vmul.f32 %v319, %v317
    %v321 = vxor.u32 %v320, 2147483648
    %v322 = vsel %vm239, %v321, %v320
    %v323 = vsub.s32 4, %v299
    %v324 = vsel %vm239, %v323, %v299
    %v325 = vsel %vm238, %v132, %v322
    %v326 = vsel %vm238, 0, %v324
    %v327 = vcosq.f32.pop %v325
    %v328 = vsinq.f32.pop %v325
    %vm329 = vweird.f32 %v132
    %v330 = vand.u32 %v326, 3
    %vm331 = vcmp.lt.s32.totalorder %v330, 2
    %vm332 = vcmp.eq.s32.totalorder %v330, 0
    %v333 = vxor.u32 %v328, 2147483648
    %v334 = vsel %vm332, %v327, %v333
    %vm335 = vcmp.eq.s32.totalorder %v330, 2
    %v336 = vxor.u32 %v327, 2147483648
    %v337 = vsel %vm335, %v336, %v328
    %v338 = vsel %vm331, %v334, %v337
    %v339 = vsel %vm329, nan, %v338
    %v340 = vand.u32 2147483647, %v130
    %vm341 = vcmp.le.f32.partialorder %v340, 0.7853982
    %vm342 = vcmp.lt.s32.totalorder %v130, 0
    %v343 = vand.u32 %v130, 2139095040
    %v344 = vshrl.u32 %v343, 23
    %v345 = vsub.s32 %v344, 127
    %v346 = vand.u32 2147483647, %v130
    %v347 = vand.u32 %v346, 8388607
    %v348 = vor.u32 %v347, 8388608
    %v349 = vsub.s32 0, %v348
    %v350 = vadd.s32 %v345, 1
    %vm351 = vcmp.gt.s32.totalorder %v350, 0
    %v352 = vsel %vm351, %v350, 0
    %v353 = vshrl.u32 %v352, 5
    %v354 = vand.u32 %v352, 31
    %v355 = vsub.s32 32, %v354
    %v356 = vshrl.u32 683565275, %v355
    %v357 = vshll.u32 683565275, %v354
    %v358 = vshrl.u32 2475754826, %v355
    %v359 = vor.u32 %v357, %v358
    %v360 = vshll.u32 2475754826, %v354
    %v361 = vshrl.u32 2131351028, %v355
    %v362 = vor.u32 %v360, %v361
    %v363 = vshll.u32 2131351028, %v354
    %v364 = vshrl.u32 2102212464, %v355
    %v365 = vor.u32 %v363, %v364
    %v366 = vshll.u32 2102212464, %v354
    %v367 = vshrl.u32 920167782, %v355
    %v368 = vor.u32 %v366, %v367
    %v369 = vshll.u32 920167782, %v354
    %v370 = vshrl.u32 1326507024, %v355
    %v371 = vor.u32 %v369, %v370
    %vm372 = vcmp.lt.s32.totalorder %v353, 1
    %vm373 = vcmp.lt.s32.totalorder %v353, 2
    %vm374 = vcmp.lt.s32.totalorder %v353, 3
    %vm375 = vcmp.lt.s32.totalorder %v353, 4
    %v376 = vsel %vm372, %v356, %v359
    %v377 = vsel %vm375, %v365, 2102212464
    %v378 = vsel %vm374, %v362, %v377
    %v379 = vsel %vm373, %v376, %v378
    %v380 = vsel %vm372, %v359, %v362
    %v381 = vsel %vm375, %v368, 920167782
    %v382 = vsel %vm374, %v365, %v381
    %v383 = vsel %vm373, %v380, %v382
    %v384 = vsel %vm372, %v362, %v365
    %v385 = vsel %vm375, %v371, 1326507024
    %v386 = vsel %vm374, %v368, %v385
    %v387 = vsel %vm373, %v384, %v386
    %v388 = vshll.u32 %v348, 8
    %v389 = vmul.u32.u64.compose %v388, %v387
    %v390 = vextract.low.u32 %v389
    %v391 = vextract.high.u32 %v389
    %v392 = vmul.u32.u64.compose %v388, %v383
    %v393 = vextract.low.u32 %v392
    %v394 = vextract.high.u32 %v392
    %v395 = vmul.u32 %v388, %v379
    %v396 = vadd.s32 %v391, %v393
    %vm397 = vc.u32 %v391, %v393
    %v398 = vadd.s32 %v394, 1
    %v399 = vsel %vm397, %v398, %v394
    %v400 = vadd.s32 %v395, %v399
    %v401 = vadd.s32 %v400, 536870912
    %v402 = vshrl.u32 %v401, 30
    %v403 = vshll.u32 %v402, 30
    %v404 = vsub.s32 %v400, %v403
    %vm405 = vcmp.lt.s32.totalorder %v404, 0
    %v406 = vsub.s32 0, %v404
    %v407 = vsel %vm405, %v406, %v404
    %v408 = vclz %v407
    %v409 = vsub.s32 %v408, 2
    %vm410 = vcmp.gt.s32.totalorder 0, %v409
    %v411 = vsel %vm410, 0, %v409
    %v412 = vsub.s32 32, %v411
    %v413 = vshll.u32 %v404, %v411
    %v414 = vshrl.u32 %v396, %v412
    %v415 = vor.u32 %v413, %v414
    %v416 = vsub.s32 4294967266, %v411
    %v417 = vadd.s32 %v416, 127
    %v418 = vshll.u32 %v417, 23
    %v419 = vor.u32 4788187, %v418
    %v420 = vand.u32 2147483647, %v419
    %v422 = vcvt.s32.f32 %v415
    %v423 = vmul.f32 %v422, %v420
    %v424 = vxor.u32 %v423, 2147483648
    %v425 = vsel %vm342, %v424, %v423
    %v426 = vsub.s32 4, %v402
    %v427 = vsel %vm342, %v426, %v402
    %v428 = vsel %vm341, %v130, %v425
    %v429 = vsel %vm341, 0, %v427
    %v430 = vcosq.f32.pop %v428
    %v431 = vsinq.f32.pop %v428
    %vm432 = vweird.f32 %v130
    %v433 = vadd.s32 %v429, 3
    %v434 = vand.u32 %v433, 3
    %vm435 = vcmp.lt.s32.totalorder %v434, 2
    %vm436 = vcmp.eq.s32.totalorder %v434, 0
    %v437 = vxor.u32 %v431, 2147483648
    %v438 = vsel %vm436, %v430, %v437
    %vm439 = vcmp.eq.s32.totalorder %v434, 2
    %v440 = vxor.u32 %v430, 2147483648
    %v441 = vsel %vm439, %v440, %v431
    %v442 = vsel %vm435, %v438, %v441
    %v443 = vsel %vm432, nan, %v442
    %v444 = vand.u32 2147483647, %v132
    %vm445 = vcmp.le.f32.partialorder %v444, 0.7853982
    %vm446 = vcmp.lt.s32.totalorder %v132, 0
    %v447 = vand.u32 %v132, 2139095040
    %v448 = vshrl.u32 %v447, 23
    %v449 = vsub.s32 %v448, 127
    %v450 = vand.u32 2147483647, %v132
    %v451 = vand.u32 %v450, 8388607
    %v452 = vor.u32 %v451, 8388608
    %v453 = vsub.s32 0, %v452
    %v454 = vadd.s32 %v449, 1
    %vm455 = vcmp.gt.s32.totalorder %v454, 0
    %v456 = vsel %vm455, %v454, 0
    %v457 = vshrl.u32 %v456, 5
    %v458 = vand.u32 %v456, 31
    %v459 = vsub.s32 32, %v458
    %v460 = vshrl.u32 683565275, %v459
    %v461 = vshll.u32 683565275, %v458
    %v462 = vshrl.u32 2475754826, %v459
    %v463 = vor.u32 %v461, %v462
    %v464 = vshll.u32 2475754826, %v458
    %v465 = vshrl.u32 2131351028, %v459
    %v466 = vor.u32 %v464, %v465
    %v467 = vshll.u32 2131351028, %v458
    %v468 = vshrl.u32 2102212464, %v459
    %v469 = vor.u32 %v467, %v468
    %v470 = vshll.u32 2102212464, %v458
    %v471 = vshrl.u32 920167782, %v459
    %v472 = vor.u32 %v470, %v471
    %v473 = vshll.u32 920167782, %v458
    %v474 = vshrl.u32 1326507024, %v459
    %v475 = vor.u32 %v473, %v474
    %vm476 = vcmp.lt.s32.totalorder %v457, 1
    %vm477 = vcmp.lt.s32.totalorder %v457, 2
    %vm478 = vcmp.lt.s32.totalorder %v457, 3
    %vm479 = vcmp.lt.s32.totalorder %v457, 4
    %v480 = vsel %vm476, %v460, %v463
    %v481 = vsel %vm479, %v469, 2102212464
    %v482 = vsel %vm478, %v466, %v481
    %v483 = vsel %vm477, %v480, %v482
    %v484 = vsel %vm476, %v463, %v466
    %v485 = vsel %vm479, %v472, 920167782
    %v486 = vsel %vm478, %v469, %v485
    %v487 = vsel %vm477, %v484, %v486
    %v488 = vsel %vm476, %v466, %v469
    %v489 = vsel %vm479, %v475, 1326507024
    %v490 = vsel %vm478, %v472, %v489
    %v491 = vsel %vm477, %v488, %v490
    %v492 = vshll.u32 %v452, 8
    %v493 = vmul.u32.u64.compose %v492, %v491
    %v494 = vextract.low.u32 %v493
    %v495 = vextract.high.u32 %v493
    %v496 = vmul.u32.u64.compose %v492, %v487
    %v497 = vextract.low.u32 %v496
    %v498 = vextract.high.u32 %v496
    %v499 = vmul.u32 %v492, %v483
    %v500 = vadd.s32 %v495, %v497
    %vm501 = vc.u32 %v495, %v497
    %v502 = vadd.s32 %v498, 1
    %v503 = vsel %vm501, %v502, %v498
    %v504 = vadd.s32 %v499, %v503
    %v505 = vadd.s32 %v504, 536870912
    %v506 = vshrl.u32 %v505, 30
    %v507 = vshll.u32 %v506, 30
    %v508 = vsub.s32 %v504, %v507
    %vm509 = vcmp.lt.s32.totalorder %v508, 0
    %v510 = vsub.s32 0, %v508
    %v511 = vsel %vm509, %v510, %v508
    %v512 = vclz %v511
    %v513 = vsub.s32 %v512, 2
    %vm514 = vcmp.gt.s32.totalorder 0, %v513
    %v515 = vsel %vm514, 0, %v513
    %v516 = vsub.s32 32, %v515
    %v517 = vshll.u32 %v508, %v515
    %v518 = vshrl.u32 %v500, %v516
    %v519 = vor.u32 %v517, %v518
    %v520 = vsub.s32 4294967266, %v515
    %v521 = vadd.s32 %v520, 127
    %v522 = vshll.u32 %v521, 23
    %v523 = vor.u32 4788187, %v522
    %v524 = vand.u32 2147483647, %v523
    %v526 = vcvt.s32.f32 %v519
    %v527 = vmul.f32 %v526, %v524
    %v528 = vxor.u32 %v527, 2147483648
    %v529 = vsel %vm446, %v528, %v527
    %v530 = vsub.s32 4, %v506
    %v531 = vsel %vm446, %v530, %v506
    %v532 = vsel %vm445, %v132, %v529
    %v533 = vsel %vm445, 0, %v531
    %v534 = vcosq.f32.pop %v532
    %v535 = vsinq.f32.pop %v532
    %vm536 = vweird.f32 %v132
    %v537 = vadd.s32 %v533, 3
    %v538 = vand.u32 %v537, 3
    %vm539 = vcmp.lt.s32.totalorder %v538, 2
    %vm540 = vcmp.eq.s32.totalorder %v538, 0
    %v541 = vxor.u32 %v535, 2147483648
    %v542 = vsel %vm540, %v534, %v541
    %vm543 = vcmp.eq.s32.totalorder %v538, 2
    %v544 = vxor.u32 %v534, 2147483648
    %v545 = vsel %vm543, %v544, %v535
    %v546 = vsel %vm539, %v542, %v545
    %v547 = vsel %vm536, nan, %v546
    %v548 = vld [vmem:[#allocation8] sm:$0xff]
    %v549 = vld [vmem:[#allocation8 + $0x8] sm:$0xff]
    %v550 = vld [vmem:[#allocation8 + $0x10] sm:$0xff]
    %v551 = vld [vmem:[#allocation8 + $0x18] sm:$0xff]
    %v552 = vld [vmem:[#allocation8 + $0x20] sm:$0xff]
    %v553 = vld [vmem:[#allocation8 + $0x28] sm:$0xff]
    %v554 = vld [vmem:[#allocation8 + $0x30] sm:$0xff]
    %v555 = vld [vmem:[#allocation8 + $0x38] sm:$0xff]
    %v556 = vld [vmem:[#allocation8 + $0x40] sm:$0xff]
    %v557 = vld [vmem:[#allocation8 + $0x48] sm:$0xff]
    %v558 = vld [vmem:[#allocation8 + $0x50] sm:$0xff]
    %v559 = vld [vmem:[#allocation8 + $0x58] sm:$0xff]
    %v560 = vld [vmem:[#allocation8 + $0x60] sm:$0xff]
    %v561 = vld [vmem:[#allocation8 + $0x68] sm:$0xff]
    %v562 = vld [vmem:[#allocation8 + $0x70] sm:$0xff]
    %v563 = vld [vmem:[#allocation8 + $0x78] sm:$0xff]
    %v564 = vld [vmem:[#allocation8 + $0x80] sm:$0xff]
    %v565 = vld [vmem:[#allocation8 + $0x88] sm:$0xff]
    %v566 = vld [vmem:[#allocation8 + $0x90] sm:$0xff]
    %v567 = vld [vmem:[#allocation8 + $0x98] sm:$0xff]
    %v568 = vld [vmem:[#allocation8 + $0xa0] sm:$0xff]
    %v569 = vld [vmem:[#allocation8 + $0xa8] sm:$0xff]
    %v570 = vld [vmem:[#allocation8 + $0xb0] sm:$0xff]
    %v571 = vld [vmem:[#allocation8 + $0xb8] sm:$0xff]
    %v572 = vld [vmem:[#allocation8 + $0xc0] sm:$0xff]
    %v573 = vld [vmem:[#allocation8 + $0xc8] sm:$0xff]
    %v574 = vld [vmem:[#allocation8 + $0xd0] sm:$0xff]
    %v575 = vld [vmem:[#allocation8 + $0xd8] sm:$0xff]
    %v576 = vld [vmem:[#allocation8 + $0xe0] sm:$0xff]
    %v577 = vld [vmem:[#allocation8 + $0xe8] sm:$0xff]
    %v578 = vld [vmem:[#allocation8 + $0xf0] sm:$0xff]
    %v579 = vld [vmem:[#allocation8 + $0xf8] sm:$0xff]
    %v580 = vld [vmem:[#allocation8 + $0x100] sm:$0xff]
    %v581 = vld [vmem:[#allocation8 + $0x108] sm:$0xff]
    %v582 = vld [vmem:[#allocation8 + $0x110] sm:$0xff]
    %v583 = vld [vmem:[#allocation8 + $0x118] sm:$0xff]
    %v584 = vld [vmem:[#allocation8 + $0x120] sm:$0xff]
    %v585 = vld [vmem:[#allocation8 + $0x128] sm:$0xff]
    %v586 = vld [vmem:[#allocation8 + $0x130] sm:$0xff]
    %v587 = vld [vmem:[#allocation8 + $0x138] sm:$0xff]
    %v588 = vld [vmem:[#allocation8 + $0x140] sm:$0xff]
    %v589 = vld [vmem:[#allocation8 + $0x148] sm:$0xff]
    %v590 = vld [vmem:[#allocation8 + $0x150] sm:$0xff]
    %v591 = vld [vmem:[#allocation8 + $0x158] sm:$0xff]
    %v592 = vld [vmem:[#allocation8 + $0x160] sm:$0xff]
    %v593 = vld [vmem:[#allocation8 + $0x168] sm:$0xff]
    %v594 = vld [vmem:[#allocation8 + $0x170] sm:$0xff]
    %v595 = vld [vmem:[#allocation8 + $0x178] sm:$0xff]
    %v596 = vld [vmem:[#allocation8 + $0x180] sm:$0xff]
    %v597 = vld [vmem:[#allocation8 + $0x188] sm:$0xff]
    %v598 = vld [vmem:[#allocation8 + $0x190] sm:$0xff]
    %v599 = vld [vmem:[#allocation8 + $0x198] sm:$0xff]
    %v600 = vld [vmem:[#allocation8 + $0x1a0] sm:$0xff]
    %v601 = vld [vmem:[#allocation8 + $0x1a8] sm:$0xff]
    %v602 = vld [vmem:[#allocation8 + $0x1b0] sm:$0xff]
    %v603 = vld [vmem:[#allocation8 + $0x1b8] sm:$0xff]
    %v604 = vld [vmem:[#allocation8 + $0x1c0] sm:$0xff]
    %v605 = vld [vmem:[#allocation8 + $0x1c8] sm:$0xff]
    %v606 = vld [vmem:[#allocation8 + $0x1d0] sm:$0xff]
    %v607 = vld [vmem:[#allocation8 + $0x1d8] sm:$0xff]
    %v608 = vld [vmem:[#allocation8 + $0x1e0] sm:$0xff]
    %v609 = vld [vmem:[#allocation8 + $0x1e8] sm:$0xff]
    %v610 = vld [vmem:[#allocation8 + $0x1f0] sm:$0xff]
    %v611 = vld [vmem:[#allocation8 + $0x1f8] sm:$0xff]
    %s612 = sld [smem:[#allocation2]]
    %v613 = vstv %s612
    %614 = vmatprep.subr.mxu0 0.0
    %615 = vmatpush1.msra.mxu0 %v548
    %616 = vmatprep.subr.mxu0 0.0
    %617 = vmatpush1.msra.mxu0 %v549
    %618 = vmatprep.subr.mxu0 0.0
    %619 = vmatpush1.msra.mxu0 %v550
    %620 = vmatprep.subr.mxu0 0.0
    %621 = vmatpush1.msra.mxu0 %v551
    %622 = vmatprep.subr.mxu0 0.0
    %623 = vmatpush1.msra.mxu0 %v552
    %624 = vmatprep.subr.mxu0 0.0
    %625 = vmatpush1.msra.mxu0 %v553
    %626 = vmatprep.subr.mxu0 0.0
    %627 = vmatpush1.msra.mxu0 %v554
    %628 = vmatprep.subr.mxu0 0.0
    %629 = vmatpush1.msra.mxu0 %v555
    %630 = vmatprep.subr.mxu0 0.0
    %631 = vmatpush1.msra.mxu0 %v556
    %632 = vmatprep.subr.mxu0 0.0
    %633 = vmatpush1.msra.mxu0 %v557
    %634 = vmatprep.subr.mxu0 0.0
    %635 = vmatpush1.msra.mxu0 %v558
    %636 = vmatprep.subr.mxu0 0.0
    %637 = vmatpush1.msra.mxu0 %v559
    %638 = vmatprep.subr.mxu0 0.0
    %639 = vmatpush1.msra.mxu0 %v560
    %640 = vmatprep.subr.mxu0 0.0
    %641 = vmatpush1.msra.mxu0 %v561
    %642 = vmatprep.subr.mxu0 0.0
    %643 = vmatpush1.msra.mxu0 %v562
    %644 = vmatprep.subr.mxu0 0.0
    %645 = vmatpush1.msra.mxu0 %v563
    %646 = vmatprep.subr.mxu0 0.0
    %647 = vmatpush1.msra.mxu0 %v564
    %648 = vmatprep.subr.mxu0 0.0
    %649 = vmatpush1.msra.mxu0 %v565
    %650 = vmatprep.subr.mxu0 0.0
    %651 = vmatpush1.msra.mxu0 %v566
    %652 = vmatprep.subr.mxu0 0.0
    %653 = vmatpush1.msra.mxu0 %v567
    %654 = vmatprep.subr.mxu0 0.0
    %655 = vmatpush1.msra.mxu0 %v568
    %656 = vmatprep.subr.mxu0 0.0
    %657 = vmatpush1.msra.mxu0 %v569
    %658 = vmatprep.subr.mxu0 0.0
    %659 = vmatpush1.msra.mxu0 %v570
    %660 = vmatprep.subr.mxu0 0.0
    %661 = vmatpush1.msra.mxu0 %v571
    %662 = vmatprep.subr.mxu0 0.0
    %663 = vmatpush1.msra.mxu0 %v572
    %664 = vmatprep.subr.mxu0 0.0
    %665 = vmatpush1.msra.mxu0 %v573
    %666 = vmatprep.subr.mxu0 0.0
    %667 = vmatpush1.msra.mxu0 %v574
    %668 = vmatprep.subr.mxu0 0.0
    %669 = vmatpush1.msra.mxu0 %v575
    %670 = vmatprep.subr.mxu0 0.0
    %671 = vmatpush1.msra.mxu0 %v576
    %672 = vmatprep.subr.mxu0 0.0
    %673 = vmatpush1.msra.mxu0 %v577
    %674 = vmatprep.subr.mxu0 0.0
    %675 = vmatpush1.msra.mxu0 %v578
    %676 = vmatprep.subr.mxu0 0.0
    %677 = vmatpush1.msra.mxu0 %v579
    %678 = vmatprep.mubr.f32.mxu0 %v339
    %679 = vmatmul.mubr.f32.gmra.mrb[0].mxu0 %v236
    %v680 = vpop.f32.mrb[0].mxu0
    %v681 = vadd.f32 %v613, %v680
    %v682 = vpop.f32.mrb[0].mxu0
    %683 = vdwg.mxu0
    %684 = vmatprep.subr.mxu0 0.0
    %685 = vmatpush1.msra.mxu0 %v580
    %686 = vmatprep.subr.mxu0 0.0
    %687 = vmatpush1.msra.mxu0 %v581
    %688 = vmatprep.subr.mxu0 0.0
    %689 = vmatpush1.msra.mxu0 %v582
    %690 = vmatprep.subr.mxu0 0.0
    %691 = vmatpush1.msra.mxu0 %v583
    %692 = vmatprep.subr.mxu0 0.0
    %693 = vmatpush1.msra.mxu0 %v584
    %694 = vmatprep.subr.mxu0 0.0
    %695 = vmatpush1.msra.mxu0 %v585
    %696 = vmatprep.subr.mxu0 0.0
    %697 = vmatpush1.msra.mxu0 %v586
    %698 = vmatprep.subr.mxu0 0.0
    %699 = vmatpush1.msra.mxu0 %v587
    %700 = vmatprep.subr.mxu0 0.0
    %701 = vmatpush1.msra.mxu0 %v588
    %702 = vmatprep.subr.mxu0 0.0
    %703 = vmatpush1.msra.mxu0 %v589
    %704 = vmatprep.subr.mxu0 0.0
    %705 = vmatpush1.msra.mxu0 %v590
    %706 = vmatprep.subr.mxu0 0.0
    %707 = vmatpush1.msra.mxu0 %v591
    %708 = vmatprep.subr.mxu0 0.0
    %709 = vmatpush1.msra.mxu0 %v592
    %710 = vmatprep.subr.mxu0 0.0
    %711 = vmatpush1.msra.mxu0 %v593
    %712 = vmatprep.subr.mxu0 0.0
    %713 = vmatpush1.msra.mxu0 %v594
    %714 = vmatprep.subr.mxu0 0.0
    %715 = vmatpush1.msra.mxu0 %v595
    %716 = vmatprep.subr.mxu0 0.0
    %717 = vmatpush1.msra.mxu0 %v596
    %718 = vmatprep.subr.mxu0 0.0
    %719 = vmatpush1.msra.mxu0 %v597
    %720 = vmatprep.subr.mxu0 0.0
    %721 = vmatpush1.msra.mxu0 %v598
    %722 = vmatprep.subr.mxu0 0.0
    %723 = vmatpush1.msra.mxu0 %v599
    %724 = vmatprep.subr.mxu0 0.0
    %725 = vmatpush1.msra.mxu0 %v600
    %726 = vmatprep.subr.mxu0 0.0
    %727 = vmatpush1.msra.mxu0 %v601
    %728 = vmatprep.subr.mxu0 0.0
    %729 = vmatpush1.msra.mxu0 %v602
    %730 = vmatprep.subr.mxu0 0.0
    %731 = vmatpush1.msra.mxu0 %v603
    %732 = vmatprep.subr.mxu0 0.0
    %733 = vmatpush1.msra.mxu0 %v604
    %734 = vmatprep.subr.mxu0 0.0
    %735 = vmatpush1.msra.mxu0 %v605
    %736 = vmatprep.subr.mxu0 0.0
    %737 = vmatpush1.msra.mxu0 %v606
    %738 = vmatprep.subr.mxu0 0.0
    %739 = vmatpush1.msra.mxu0 %v607
    %740 = vmatprep.subr.mxu0 0.0
    %741 = vmatpush1.msra.mxu0 %v608
    %742 = vmatprep.subr.mxu0 0.0
    %743 = vmatpush1.msra.mxu0 %v609
    %744 = vmatprep.subr.mxu0 0.0
    %745 = vmatpush1.msra.mxu0 %v610
    %746 = vmatprep.subr.mxu0 0.0
    %747 = vmatpush1.msra.mxu0 %v611
    %748 = vmatprep.mubr.f32.mxu0 %v547
    %749 = vmatmul.mubr.f32.gmra.mrb[0].mxu0 %v443
    %v750 = vpop.f32.mrb[0].mxu0
    %v751 = vadd.f32 %v681, %v750
    %v752 = vpop.f32.mrb[0].mxu0
    %753 = vdwg.mxu0
    %754 = vst [vmem:[#allocation9] sm:$0xff] %v751
    // Predicated region
    $region30: #{tpu_custom_call.1} parent=1 // pred_check
      _
    $region31: #{tpu_custom_call.1} parent=1 // pred_check_branch
      %756 = sbr.rel (0) target = $region33
    $region32: #{tpu_custom_call.1} parent=1 // pred_region
      %s758 = ssub.s32 128, 128
      %759 = vsyncadd [#allocation5], %s758
      %s761 = sshll.u32 [#allocation9], 4
      %s762 = int_to_ptr.vmem [resolvable:$true] %s761
      %764 = dma.vmem_to_hbm [thread:$0]  %s762, 128, %s4, [#allocation5]
    $region33: #{tpu_custom_call.1} parent=1 // pred_fallthru
      _
    // Predicated region
    $region34: #{tpu_custom_call.1} parent=1 // pred_check
      _
    $region35: #{tpu_custom_call.1} parent=1 // pred_check_branch
      %766 = sbr.rel (0) target = $region37
    $region36: #{tpu_custom_call.1} parent=1 // pred_region
      %767 = dma.done [#allocation5], 128
    $region37: #{tpu_custom_call.1} parent=1 // pred_fallthru
      _
    %768 = vsyncpa [#allocation4], 1
    %769 = vsyncpa [#allocation7], 1
    %770 = vsyncpa [#allocation5], 1

</llo_original>
